<compile_context>
chip_gen: v7x
topology: tpu7x:2x2x1
jax: 0.10.0
libtpu: 0.0.40
codegen_flags: <defaults>
</compile_context>

<pallas_src>
import functools

import jax
import jax.numpy as jnp
from jax.experimental import pallas as pl
from jax.experimental.pallas import tpu as pltpu


def _avgpool_matmul_kernel(x_ref, p_ref, o_ref, *, inv_area):
    # x_ref: (rt, Kg) streamed input rows; p_ref: (Kg, Wg) one-hot {0,1} pooling matrix
    # (bf16, exactly representable); o_ref: (rt, Wg) lane-dense output rows.
    xb = x_ref[...].astype(jnp.float32)
    # Exact f32 pooling using only 3 single-pass bf16 matmuls (vs 6 for Precision.HIGHEST):
    # xb == x1 + x2 + x3 exactly (3-way bf16 split of an f32), and each bf16 * {0,1}
    # product is exact with f32 accumulation on the MXU.
    x1 = xb.astype(jnp.bfloat16)
    r1 = xb - x1.astype(jnp.float32)
    x2 = r1.astype(jnp.bfloat16)
    x3 = (r1 - x2.astype(jnp.float32)).astype(jnp.bfloat16)
    p = p_ref[...]
    acc = jnp.dot(x1, p, preferred_element_type=jnp.float32)
    acc = acc + jnp.dot(x2, p, preferred_element_type=jnp.float32)
    acc = acc + jnp.dot(x3, p, preferred_element_type=jnp.float32)
    o_ref[...] = (acc * inv_area).astype(o_ref.dtype)


def _pick_group_size(w_out, rows):
    """Pooled rows packed per matmul row so the output last dim is >= 128 lanes."""
    if w_out >= 128 or rows <= 1:
        return 1
    g_min = -(-128 // w_out)                      # ceil(128 / Wout): lane-dense threshold
    g_max = min(rows, max(g_min, 256 // w_out))   # bounded overshoot keeps MXU work cheap
    for g in range(g_min, g_max + 1):
        if rows % g == 0:
            return g
    for g in range(min(g_min, rows), 0, -1):      # fallback: best divisor below target
        if rows % g == 0:
            return g
    return 1


def super_resolution_forward(x, factor, noise_std=0.0, *, target_tile_bytes=4 << 20):
    """x: (N, C, H, W) float32. Returns avg_pool2d(x, factor): (N, C, H//f, W//f)."""
    if noise_std > 0.0:
        # TODO(synk): additive-Gaussian branch (torch.randn_like under
        # EncapsulatedRandomState) is not implemented in this kernel.
        raise NotImplementedError("noise_std > 0 not supported in this kernel")

    N, C, H, W = x.shape
    f = int(factor)
    H_out, W_out = H // f, W // f
    H_c, W_c = H_out * f, W_out * f
    # F.avg_pool2d floor semantics: drop trailing rows/cols that don't fill a window.
    # TODO(synk): for non-divisible H/W this XLA slice costs one extra HBM pass; it could
    # be folded into P (zero columns) / the row index_map to keep a single read of x.
    if (H_c, W_c) != (H, W):
        x = x[:, :, :H_c, :W_c]

    K = f * W_c                      # one f x Wc input slab per pooled output row
    R = N * C * H_out                # total pooled output rows
    g = _pick_group_size(W_out, R)   # pooled rows grouped per matmul row (lane density)
    R2, Kg, Wg = R // g, g * K, g * W_out
    x2 = x.reshape(R2, Kg)           # contiguous reshape of NCHW -> no data movement

    # Block-diagonal one-hot pooling matrix: P[k, c] = 1 iff element k of a grouped row
    # feeds output column c. Entries are exactly 0/1 (bf16-exact); the 1/f^2 scaling is
    # applied to the f32 accumulator inside the kernel (exact for any f, incl. f=3).
    k = jnp.arange(Kg)
    col = (k // K) * W_out + ((k % K) % W_c) // f
    P = jax.nn.one_hot(col, Wg, dtype=jnp.float32).astype(jnp.bfloat16)

    # Row tile: as many rows as fit the per-block byte budget (big tiles -> HBM roofline),
    # multiple of 8 sublanes, no artificial cap. Cap at ceil(R2/2) so the "parallel" grid
    # has >= 2 steps for v7x's two TensorCores whenever the row count allows it.
    itemsize = jnp.dtype(x.dtype).itemsize
    if R2 <= 8:
        rt = R2                                    # single block == full (tiny) row dim
    else:
        rt = max(8, (int(target_tile_bytes) // (Kg * itemsize)) // 8 * 8)
        half_up = ((-(-R2 // 2)) + 7) // 8 * 8
        rt = min(rt, max(8, half_up))
    grid_r = pl.cdiv(R2, rt)   # non-divisible last block: OOB output rows are masked

    out2 = pl.pallas_call(
        functools.partial(_avgpool_matmul_kernel, inv_area=1.0 / (f * f)),
        out_shape=jax.ShapeDtypeStruct((R2, Wg), x.dtype),
        grid_spec=pltpu.PrefetchScalarGridSpec(
            num_scalar_prefetch=0,
            grid=(grid_r,),
            in_specs=[
                pl.BlockSpec((rt, Kg), lambda i: (i, 0)),   # streamed input row tiles
                pl.BlockSpec((Kg, Wg), lambda i: (0, 0)),   # constant P (DMA'd once)
            ],
            out_specs=pl.BlockSpec((rt, Wg), lambda i: (i, 0)),
        ),
        compiler_params=pltpu.CompilerParams(
            dimension_semantics=("parallel",),
            vmem_limit_bytes=48 * 1024 * 1024,   # headroom above v5e's 16 MiB default,
        ),                                       # well under v7x's 64 MiB physical VMEM
    )(x2, P)

    return out2.reshape(N, C, H_out, W_out)


if __name__ == "__main__":
    def ref_avg_pool(x, f):
        n, c, h, w = x.shape
        ho, wo = h // f, w // f
        xc = x[:, :, : ho * f, : wo * f]
        return xc.reshape(n, c, ho, f, wo, f).mean(axis=(3, 5))

    k0, k1, k2 = jax.random.split(jax.random.PRNGKey(0), 3)

    # Primary case (matches the module's typical small input).
    xa = jax.random.normal(k0, (2, 4, 16, 16), dtype=jnp.float32)
    oa = jax.block_until_ready(super_resolution_forward(xa, 2))
    assert oa.shape == (2, 4, 8, 8)
    assert jnp.allclose(oa, ref_avg_pool(xa, 2), atol=1e-5, rtol=1e-5), "mismatch (case A)"

    # Non-divisible spatial dims (floor-crop path) and factor 3 (non power-of-two scale).
    xb = jax.random.normal(k1, (2, 3, 40, 24), dtype=jnp.float32)
    ob = jax.block_until_ready(super_resolution_forward(xb, 3))
    assert ob.shape == (2, 3, 13, 8)
    assert jnp.allclose(ob, ref_avg_pool(xb, 3), atol=1e-5, rtol=1e-5), "mismatch (case B)"

    # Multi-step grid with a partial (non-divisible) last block and no padding.
    xc = jax.random.normal(k2, (1, 7, 64, 64), dtype=jnp.float32)
    oc = jax.block_until_ready(super_resolution_forward(xc, 2))
    assert oc.shape == (1, 7, 32, 32)
    assert jnp.allclose(oc, ref_avg_pool(xc, 2), atol=1e-5, rtol=1e-5), "mismatch (case C)"

    print("KERNEL_OK")
</pallas_src>

<mosaic_0001>
module attributes {stable_mosaic.version = 11 : i64} {
  func.func @_avgpool_matmul_kernel(%arg0: i32, %arg1: memref<4x512xf32, #tpu.memory_space<vmem>>, %arg2: memref<512x128xbf16, #tpu.memory_space<vmem>>, %arg3: memref<4x128xf32, #tpu.memory_space<vmem>>) attributes {dimension_semantics = [#tpu.dimension_semantics<parallel>], iteration_bounds = array<i64: 1>, scalar_prefetch = 0 : i64, scratch_operands = 0 : i64, tpu.core_type = #tpu.core_type<tc>, window_params = [{transform_indices = @transform_0, window_bounds = array<i64: 4, 512>}, {pipeline_mode = #tpu.pipeline_mode<synchronous>, transform_indices = @transform_1, window_bounds = array<i64: 512, 128>}, {transform_indices = @transform_2, window_bounds = array<i64: 4, 128>}]} {
    %c0 = arith.constant 0 : index
    %c0_0 = arith.constant 0 : index
    %0 = vector.load %arg1[%c0, %c0_0] : memref<4x512xf32, #tpu.memory_space<vmem>>, vector<4x512xf32>
    %1 = arith.truncf %0 : vector<4x512xf32> to vector<4x512xbf16>
    %2 = arith.extf %1 : vector<4x512xbf16> to vector<4x512xf32>
    %3 = arith.subf %0, %2 : vector<4x512xf32>
    %4 = arith.truncf %3 : vector<4x512xf32> to vector<4x512xbf16>
    %5 = arith.extf %4 : vector<4x512xbf16> to vector<4x512xf32>
    %6 = arith.subf %3, %5 : vector<4x512xf32>
    %7 = arith.truncf %6 : vector<4x512xf32> to vector<4x512xbf16>
    %c0_1 = arith.constant 0 : index
    %c0_2 = arith.constant 0 : index
    %8 = vector.load %arg2[%c0_1, %c0_2] : memref<512x128xbf16, #tpu.memory_space<vmem>>, vector<512x128xbf16>
    %cst = arith.constant dense<0.000000e+00> : vector<4x128xf32>
    %9 = tpu.matmul %1, %8, %cst {dimension_numbers = #tpu.dot_dimension_numbers<[1], [0], [0], [1], [0, 0, 1, 1], [], []>} : vector<4x512xbf16>, vector<512x128xbf16>, vector<4x128xf32> -> vector<4x128xf32>
    %cst_3 = arith.constant dense<0.000000e+00> : vector<4x128xf32>
    %10 = tpu.matmul %4, %8, %cst_3 {dimension_numbers = #tpu.dot_dimension_numbers<[1], [0], [0], [1], [0, 0, 1, 1], [], []>} : vector<4x512xbf16>, vector<512x128xbf16>, vector<4x128xf32> -> vector<4x128xf32>
    %11 = arith.addf %9, %10 : vector<4x128xf32>
    %cst_4 = arith.constant dense<0.000000e+00> : vector<4x128xf32>
    %12 = tpu.matmul %7, %8, %cst_4 {dimension_numbers = #tpu.dot_dimension_numbers<[1], [0], [0], [1], [0, 0, 1, 1], [], []>} : vector<4x512xbf16>, vector<512x128xbf16>, vector<4x128xf32> -> vector<4x128xf32>
    %13 = arith.addf %11, %12 : vector<4x128xf32>
    %cst_5 = arith.constant 2.500000e-01 : f32
    %14 = vector.broadcast %cst_5 : f32 to vector<4x128xf32>
    %15 = arith.mulf %13, %14 : vector<4x128xf32>
    %c0_6 = arith.constant 0 : index
    %c0_7 = arith.constant 0 : index
    %16 = vector.load %arg3[%c0_6, %c0_7] : memref<4x128xf32, #tpu.memory_space<vmem>>, vector<4x128xf32>
    tpu.vector_store %arg3[%c0_6, %c0_7], %15 {strides = array<i32>} : memref<4x128xf32, #tpu.memory_space<vmem>>, vector<4x128xf32>,
    return
  }
  func.func @transform_0(%arg0: i32) -> (i32, i32) {
    %c0_i32 = arith.constant 0 : i32
    %c0_i32_0 = arith.constant 0 : i32
    return %arg0, %c0_i32 : i32, i32
  }
  func.func @transform_1(%arg0: i32) -> (i32, i32) {
    %c0_i32 = arith.constant 0 : i32
    %c0_i32_0 = arith.constant 0 : i32
    %c0_i32_1 = arith.constant 0 : i32
    return %c0_i32, %c0_i32_0 : i32, i32
  }
  func.func @transform_2(%arg0: i32) -> (i32, i32) {
    %c0_i32 = arith.constant 0 : i32
    %c0_i32_0 = arith.constant 0 : i32
    return %arg0, %c0_i32 : i32, i32
  }
}

</mosaic_0001>

<llo_original>
// kernel: tpu_custom_call.1
$region0: #{tpu_custom_call.1}
  #allocation0 [shape = 'u32[]', space=smem, size = 0x4, offset = 0x4, fixed_abs, tag = 'smem constant byte address 0x4 - core index']
  #allocation1 [shape = 'u32[144,128]{1,0:T(1,128)}', space=vmem, size = 0x12000, scoped, tag = 'internal scratch']
  %s0 = inlined_call_operand.hbm [shape: f32[4,512], index: 0, kind: input, shape index: {}]
  %s1 = inlined_call_operand.hbm [shape: bf16[512,128], index: 1, kind: input, shape index: {}]
  %s2 = inlined_call_operand.hbm [shape: f32[4,128], index: 2, kind: output, shape index: {}]
  %s3 = sld [smem:[#allocation0]]
  $region26: #{tpu_custom_call.1} parent=0
    _
  %s5 = ssub.s32 1, %s3
  %s6 = scalar_select 0, %s5, %s3
  $region1: #{tpu_custom_call.1} parent=0
    #allocation2 [shape = 'u8[8192]{0}', space=vmem, size = 0x2000, scoped, tag = 'input window, operand 0, single buffered']
    #allocation3 [shape = 's32[1]{0}', space=sflag, size = 0x4, scoped, tag = 'scoped memory for tpu_custom_call.1']
    #allocation4 [shape = 's32[1]{0}', space=sflag, size = 0x4, scoped, tag = 'scoped memory for tpu_custom_call.1']
    #allocation5 [shape = 'u8[131072]{0}', space=vmem, size = 0x20000, scoped, tag = 'input window, operand 1, single buffered']
    #allocation6 [shape = 's32[1]{0}', space=sflag, size = 0x4, scoped, tag = 'scoped memory for tpu_custom_call.1']
    #allocation7 [shape = 'u8[2048]{0}', space=vmem, size = 0x800, scoped, tag = 'output window, operand 0, single buffered']
    %7 = vsyncpa [#allocation3], 0
    %8 = vsyncpa [#allocation6], 0
    %9 = vsyncpa [#allocation4], 0
    // Predicated region
    $region2: #{tpu_custom_call.1} parent=1 // pred_check
      _
    $region3: #{tpu_custom_call.1} parent=1 // pred_check_branch
      %11 = sbr.rel (0) target = $region5
    $region4: #{tpu_custom_call.1} parent=1 // pred_region
      %s13 = ssub.s32 256, 256
      %14 = vsyncadd [#allocation3], %s13
      %s16 = sshll.u32 [#allocation2], 4
      %s17 = int_to_ptr.vmem [resolvable:$true] %s16
      %19 = dma.hbm_to_vmem [thread:$0]  %s0, 256, %s17, [#allocation3]
    $region5: #{tpu_custom_call.1} parent=1 // pred_fallthru
      _
    // Predicated region
    $region6: #{tpu_custom_call.1} parent=1 // pred_check
      _
    $region7: #{tpu_custom_call.1} parent=1 // pred_check_branch
      %21 = sbr.rel (0) target = $region9
    $region8: #{tpu_custom_call.1} parent=1 // pred_region
      %s23 = ssub.s32 4096, 4096
      %24 = vsyncadd [#allocation6], %s23
      %s25 = sshll.u32 [#allocation5], 4
      %s26 = int_to_ptr.vmem [resolvable:$true] %s25
      %31 = dma.hbm_to_vmem [thread:$0]  %s1, 4096, %s26, [#allocation6], 64, 64, 4
    $region9: #{tpu_custom_call.1} parent=1 // pred_fallthru
      _
    // Predicated region
    $region10: #{tpu_custom_call.1} parent=1 // pred_check
      _
    $region11: #{tpu_custom_call.1} parent=1 // pred_check_branch
      %33 = sbr.rel (0) target = $region13
    $region12: #{tpu_custom_call.1} parent=1 // pred_region
      %34 = dma.done [#allocation3], 256
    $region13: #{tpu_custom_call.1} parent=1 // pred_fallthru
      _
    // Predicated region
    $region14: #{tpu_custom_call.1} parent=1 // pred_check
      _
    $region15: #{tpu_custom_call.1} parent=1 // pred_check_branch
      %36 = sbr.rel (0) target = $region17
    $region16: #{tpu_custom_call.1} parent=1 // pred_region
      %37 = dma.done [#allocation6], 4096
    $region17: #{tpu_custom_call.1} parent=1 // pred_fallthru
      _
    %v39 = vld [vmem:[#allocation2] sm:$0xff]
    %v40 = vld [vmem:[#allocation2 + $0x8] sm:$0xff]
    %v43 = vcombine.high %v39, %v39
    %v44 = vcombine.high %v40, %v40
    %v47 = vpack.c.bf16 %v39, %v39
    %v48 = vpack.c.bf16 %v43, %v43
    %v49 = vpack.c.bf16 %v40, %v40
    %v50 = vpack.c.bf16 %v44, %v44
    %v51 = vunpack.c.l.bf16 %v47
    %v52 = vunpack.c.l.bf16 %v48
    %v53 = vunpack.c.l.bf16 %v49
    %v54 = vunpack.c.l.bf16 %v50
    %v59 = vcombine.low %v51, %v52
    %v60 = vcombine.low %v53, %v54
    %v63 = vsub.f32 %v39, %v59
    %v64 = vsub.f32 %v40, %v60
    %v67 = vcombine.high %v63, %v63
    %v68 = vcombine.high %v64, %v64
    %v71 = vpack.c.bf16 %v63, %v63
    %v72 = vpack.c.bf16 %v67, %v67
    %v73 = vpack.c.bf16 %v64, %v64
    %v74 = vpack.c.bf16 %v68, %v68
    %v75 = vunpack.c.l.bf16 %v71
    %v76 = vunpack.c.l.bf16 %v72
    %v77 = vunpack.c.l.bf16 %v73
    %v78 = vunpack.c.l.bf16 %v74
    %v83 = vcombine.low %v75, %v76
    %v84 = vcombine.low %v77, %v78
    %v87 = vsub.f32 %v63, %v83
    %v88 = vsub.f32 %v64, %v84
    %v91 = vcombine.high %v87, %v87
    %v92 = vcombine.high %v88, %v88
    %v95 = vpack.c.bf16 %v87, %v87
    %v96 = vpack.c.bf16 %v91, %v91
    %v97 = vpack.c.bf16 %v88, %v88
    %v98 = vpack.c.bf16 %v92, %v92
    %v99 = vld [vmem:[#allocation5] sm:$0xf]
    %v100 = vld [vmem:[#allocation5 + $0x4] sm:$0xf]
    %v101 = vld [vmem:[#allocation5 + $0x8] sm:$0xf]
    %v102 = vld [vmem:[#allocation5 + $0xc] sm:$0xf]
    %v103 = vld [vmem:[#allocation5 + $0x10] sm:$0xf]
    %v104 = vld [vmem:[#allocation5 + $0x14] sm:$0xf]
    %v105 = vld [vmem:[#allocation5 + $0x18] sm:$0xf]
    %v106 = vld [vmem:[#allocation5 + $0x1c] sm:$0xf]
    %v107 = vld [vmem:[#allocation5 + $0x20] sm:$0xf]
    %v108 = vld [vmem:[#allocation5 + $0x24] sm:$0xf]
    %v109 = vld [vmem:[#allocation5 + $0x28] sm:$0xf]
    %v110 = vld [vmem:[#allocation5 + $0x2c] sm:$0xf]
    %v111 = vld [vmem:[#allocation5 + $0x30] sm:$0xf]
    %v112 = vld [vmem:[#allocation5 + $0x34] sm:$0xf]
    %v113 = vld [vmem:[#allocation5 + $0x38] sm:$0xf]
    %v114 = vld [vmem:[#allocation5 + $0x3c] sm:$0xf]
    %v115 = vld [vmem:[#allocation5 + $0x40] sm:$0xf]
    %v116 = vld [vmem:[#allocation5 + $0x44] sm:$0xf]
    %v117 = vld [vmem:[#allocation5 + $0x48] sm:$0xf]
    %v118 = vld [vmem:[#allocation5 + $0x4c] sm:$0xf]
    %v119 = vld [vmem:[#allocation5 + $0x50] sm:$0xf]
    %v120 = vld [vmem:[#allocation5 + $0x54] sm:$0xf]
    %v121 = vld [vmem:[#allocation5 + $0x58] sm:$0xf]
    %v122 = vld [vmem:[#allocation5 + $0x5c] sm:$0xf]
    %v123 = vld [vmem:[#allocation5 + $0x60] sm:$0xf]
    %v124 = vld [vmem:[#allocation5 + $0x64] sm:$0xf]
    %v125 = vld [vmem:[#allocation5 + $0x68] sm:$0xf]
    %v126 = vld [vmem:[#allocation5 + $0x6c] sm:$0xf]
    %v127 = vld [vmem:[#allocation5 + $0x70] sm:$0xf]
    %v128 = vld [vmem:[#allocation5 + $0x74] sm:$0xf]
    %v129 = vld [vmem:[#allocation5 + $0x78] sm:$0xf]
    %v130 = vld [vmem:[#allocation5 + $0x7c] sm:$0xf]
    %v131 = vld [vmem:[#allocation5 + $0x80] sm:$0xf]
    %v132 = vld [vmem:[#allocation5 + $0x84] sm:$0xf]
    %v133 = vld [vmem:[#allocation5 + $0x88] sm:$0xf]
    %v134 = vld [vmem:[#allocation5 + $0x8c] sm:$0xf]
    %v135 = vld [vmem:[#allocation5 + $0x90] sm:$0xf]
    %v136 = vld [vmem:[#allocation5 + $0x94] sm:$0xf]
    %v137 = vld [vmem:[#allocation5 + $0x98] sm:$0xf]
    %v138 = vld [vmem:[#allocation5 + $0x9c] sm:$0xf]
    %v139 = vld [vmem:[#allocation5 + $0xa0] sm:$0xf]
    %v140 = vld [vmem:[#allocation5 + $0xa4] sm:$0xf]
    %v141 = vld [vmem:[#allocation5 + $0xa8] sm:$0xf]
    %v142 = vld [vmem:[#allocation5 + $0xac] sm:$0xf]
    %v143 = vld [vmem:[#allocation5 + $0xb0] sm:$0xf]
    %v144 = vld [vmem:[#allocation5 + $0xb4] sm:$0xf]
    %v145 = vld [vmem:[#allocation5 + $0xb8] sm:$0xf]
    %v146 = vld [vmem:[#allocation5 + $0xbc] sm:$0xf]
    %v147 = vld [vmem:[#allocation5 + $0xc0] sm:$0xf]
    %v148 = vld [vmem:[#allocation5 + $0xc4] sm:$0xf]
    %v149 = vld [vmem:[#allocation5 + $0xc8] sm:$0xf]
    %v150 = vld [vmem:[#allocation5 + $0xcc] sm:$0xf]
    %v151 = vld [vmem:[#allocation5 + $0xd0] sm:$0xf]
    %v152 = vld [vmem:[#allocation5 + $0xd4] sm:$0xf]
    %v153 = vld [vmem:[#allocation5 + $0xd8] sm:$0xf]
    %v154 = vld [vmem:[#allocation5 + $0xdc] sm:$0xf]
    %v155 = vld [vmem:[#allocation5 + $0xe0] sm:$0xf]
    %v156 = vld [vmem:[#allocation5 + $0xe4] sm:$0xf]
    %v157 = vld [vmem:[#allocation5 + $0xe8] sm:$0xf]
    %v158 = vld [vmem:[#allocation5 + $0xec] sm:$0xf]
    %v159 = vld [vmem:[#allocation5 + $0xf0] sm:$0xf]
    %v160 = vld [vmem:[#allocation5 + $0xf4] sm:$0xf]
    %v161 = vld [vmem:[#allocation5 + $0xf8] sm:$0xf]
    %v162 = vld [vmem:[#allocation5 + $0xfc] sm:$0xf]
    %v227 = vunpack.c.l.b16 %v99
    %v228 = vunpack.c.l.b16 %v100
    %v229 = vunpack.c.l.b16 %v101
    %v230 = vunpack.c.l.b16 %v102
    %v231 = vunpack.c.l.b16 %v103
    %v232 = vunpack.c.l.b16 %v104
    %v233 = vunpack.c.l.b16 %v105
    %v234 = vunpack.c.l.b16 %v106
    %v235 = vunpack.c.l.b16 %v107
    %v236 = vunpack.c.l.b16 %v108
    %v237 = vunpack.c.l.b16 %v109
    %v238 = vunpack.c.l.b16 %v110
    %v239 = vunpack.c.l.b16 %v111
    %v240 = vunpack.c.l.b16 %v112
    %v241 = vunpack.c.l.b16 %v113
    %v242 = vunpack.c.l.b16 %v114
    %v243 = vunpack.c.l.b16 %v115
    %v244 = vunpack.c.l.b16 %v116
    %v245 = vunpack.c.l.b16 %v117
    %v246 = vunpack.c.l.b16 %v118
    %v247 = vunpack.c.l.b16 %v119
    %v248 = vunpack.c.l.b16 %v120
    %v249 = vunpack.c.l.b16 %v121
    %v250 = vunpack.c.l.b16 %v122
    %v251 = vunpack.c.l.b16 %v123
    %v252 = vunpack.c.l.b16 %v124
    %v253 = vunpack.c.l.b16 %v125
    %v254 = vunpack.c.l.b16 %v126
    %v255 = vunpack.c.l.b16 %v127
    %v256 = vunpack.c.l.b16 %v128
    %v257 = vunpack.c.l.b16 %v129
    %v258 = vunpack.c.l.b16 %v130
    %v259 = vunpack.c.l.b16 %v131
    %v260 = vunpack.c.l.b16 %v132
    %v261 = vunpack.c.l.b16 %v133
    %v262 = vunpack.c.l.b16 %v134
    %v263 = vunpack.c.l.b16 %v135
    %v264 = vunpack.c.l.b16 %v136
    %v265 = vunpack.c.l.b16 %v137
    %v266 = vunpack.c.l.b16 %v138
    %v267 = vunpack.c.l.b16 %v139
    %v268 = vunpack.c.l.b16 %v140
    %v269 = vunpack.c.l.b16 %v141
    %v270 = vunpack.c.l.b16 %v142
    %v271 = vunpack.c.l.b16 %v143
    %v272 = vunpack.c.l.b16 %v144
    %v273 = vunpack.c.l.b16 %v145
    %v274 = vunpack.c.l.b16 %v146
    %v275 = vunpack.c.l.b16 %v147
    %v276 = vunpack.c.l.b16 %v148
    %v277 = vunpack.c.l.b16 %v149
    %v278 = vunpack.c.l.b16 %v150
    %v279 = vunpack.c.l.b16 %v151
    %v280 = vunpack.c.l.b16 %v152
    %v281 = vunpack.c.l.b16 %v153
    %v282 = vunpack.c.l.b16 %v154
    %v283 = vunpack.c.l.b16 %v155
    %v284 = vunpack.c.l.b16 %v156
    %v285 = vunpack.c.l.b16 %v157
    %v286 = vunpack.c.l.b16 %v158
    %v287 = vunpack.c.l.b16 %v159
    %v288 = vunpack.c.l.b16 %v160
    %v289 = vunpack.c.l.b16 %v161
    %v290 = vunpack.c.l.b16 %v162
    %v291 = vpack.c.b16 %v228, %v227
    %v292 = vpack.c.b16 %v230, %v229
    %v293 = vpack.c.b16 %v232, %v231
    %v294 = vpack.c.b16 %v234, %v233
    %v295 = vpack.c.b16 %v236, %v235
    %v296 = vpack.c.b16 %v238, %v237
    %v297 = vpack.c.b16 %v240, %v239
    %v298 = vpack.c.b16 %v242, %v241
    %v299 = vpack.c.b16 %v244, %v243
    %v300 = vpack.c.b16 %v246, %v245
    %v301 = vpack.c.b16 %v248, %v247
    %v302 = vpack.c.b16 %v250, %v249
    %v303 = vpack.c.b16 %v252, %v251
    %v304 = vpack.c.b16 %v254, %v253
    %v305 = vpack.c.b16 %v256, %v255
    %v306 = vpack.c.b16 %v258, %v257
    %v307 = vpack.c.b16 %v260, %v259
    %v308 = vpack.c.b16 %v262, %v261
    %v309 = vpack.c.b16 %v264, %v263
    %v310 = vpack.c.b16 %v266, %v265
    %v311 = vpack.c.b16 %v268, %v267
    %v312 = vpack.c.b16 %v270, %v269
    %v313 = vpack.c.b16 %v272, %v271
    %v314 = vpack.c.b16 %v274, %v273
    %v315 = vpack.c.b16 %v276, %v275
    %v316 = vpack.c.b16 %v278, %v277
    %v317 = vpack.c.b16 %v280, %v279
    %v318 = vpack.c.b16 %v282, %v281
    %v319 = vpack.c.b16 %v284, %v283
    %v320 = vpack.c.b16 %v286, %v285
    %v321 = vpack.c.b16 %v288, %v287
    %v322 = vpack.c.b16 %v290, %v289
    %355 = vmatprep.subr.bf16.mxu0 0
    %356 = vmatpush1.bf16.msra.mxu0 %v291
    %357 = vmatprep.subr.bf16.mxu0 0
    %358 = vmatpush1.bf16.msra.mxu0 %v292
    %359 = vmatprep.subr.bf16.mxu0 0
    %360 = vmatpush1.bf16.msra.mxu0 %v293
    %361 = vmatprep.subr.bf16.mxu0 0
    %362 = vmatpush1.bf16.msra.mxu0 %v294
    %363 = vmatprep.subr.bf16.mxu0 0
    %364 = vmatpush1.bf16.msra.mxu0 %v295
    %365 = vmatprep.subr.bf16.mxu0 0
    %366 = vmatpush1.bf16.msra.mxu0 %v296
    %367 = vmatprep.subr.bf16.mxu0 0
    %368 = vmatpush1.bf16.msra.mxu0 %v297
    %369 = vmatprep.subr.bf16.mxu0 0
    %370 = vmatpush1.bf16.msra.mxu0 %v298
    %371 = vmatprep.subr.bf16.mxu0 0
    %372 = vmatpush1.bf16.msra.mxu0 %v299
    %373 = vmatprep.subr.bf16.mxu0 0
    %374 = vmatpush1.bf16.msra.mxu0 %v300
    %375 = vmatprep.subr.bf16.mxu0 0
    %376 = vmatpush1.bf16.msra.mxu0 %v301
    %377 = vmatprep.subr.bf16.mxu0 0
    %378 = vmatpush1.bf16.msra.mxu0 %v302
    %379 = vmatprep.subr.bf16.mxu0 0
    %380 = vmatpush1.bf16.msra.mxu0 %v303
    %381 = vmatprep.subr.bf16.mxu0 0
    %382 = vmatpush1.bf16.msra.mxu0 %v304
    %383 = vmatprep.subr.bf16.mxu0 0
    %384 = vmatpush1.bf16.msra.mxu0 %v305
    %385 = vmatprep.subr.bf16.mxu0 0
    %386 = vmatpush1.bf16.msra.mxu0 %v306
    %387 = vmatprep.mubr.bf16.mxu0 %v72
    %388 = vmatmul.mubr.bf16.gmra.mrb[0].mxu0 %v71
    %v389 = vpop.f32.mrb[0].mxu0
    %v390 = vadd.f32 0.0, %v389
    %v391 = vpop.f32.mrb[0].mxu0
    %v392 = vpop.f32.mrb[0].mxu0
    %v393 = vpop.f32.mrb[0].mxu0
    %394 = vdwg.mxu0
    %395 = vmatprep.subr.bf16.mxu0 0
    %396 = vmatpush1.bf16.msra.mxu0 %v307
    %397 = vmatprep.subr.bf16.mxu0 0
    %398 = vmatpush1.bf16.msra.mxu0 %v308
    %399 = vmatprep.subr.bf16.mxu0 0
    %400 = vmatpush1.bf16.msra.mxu0 %v309
    %401 = vmatprep.subr.bf16.mxu0 0
    %402 = vmatpush1.bf16.msra.mxu0 %v310
    %403 = vmatprep.subr.bf16.mxu0 0
    %404 = vmatpush1.bf16.msra.mxu0 %v311
    %405 = vmatprep.subr.bf16.mxu0 0
    %406 = vmatpush1.bf16.msra.mxu0 %v312
    %407 = vmatprep.subr.bf16.mxu0 0
    %408 = vmatpush1.bf16.msra.mxu0 %v313
    %409 = vmatprep.subr.bf16.mxu0 0
    %410 = vmatpush1.bf16.msra.mxu0 %v314
    %411 = vmatprep.subr.bf16.mxu0 0
    %412 = vmatpush1.bf16.msra.mxu0 %v315
    %413 = vmatprep.subr.bf16.mxu0 0
    %414 = vmatpush1.bf16.msra.mxu0 %v316
    %415 = vmatprep.subr.bf16.mxu0 0
    %416 = vmatpush1.bf16.msra.mxu0 %v317
    %417 = vmatprep.subr.bf16.mxu0 0
    %418 = vmatpush1.bf16.msra.mxu0 %v318
    %419 = vmatprep.subr.bf16.mxu0 0
    %420 = vmatpush1.bf16.msra.mxu0 %v319
    %421 = vmatprep.subr.bf16.mxu0 0
    %422 = vmatpush1.bf16.msra.mxu0 %v320
    %423 = vmatprep.subr.bf16.mxu0 0
    %424 = vmatpush1.bf16.msra.mxu0 %v321
    %425 = vmatprep.subr.bf16.mxu0 0
    %426 = vmatpush1.bf16.msra.mxu0 %v322
    %427 = vmatprep.mubr.bf16.mxu0 %v74
    %428 = vmatmul.mubr.bf16.gmra.mrb[0].mxu0 %v73
    %v429 = vpop.f32.mrb[0].mxu0
    %v430 = vadd.f32 %v390, %v429
    %v431 = vpop.f32.mrb[0].mxu0
    %v432 = vpop.f32.mrb[0].mxu0
    %v433 = vpop.f32.mrb[0].mxu0
    %434 = vdwg.mxu0
    %435 = vmatprep.subr.bf16.mxu0 0
    %436 = vmatpush1.bf16.msra.mxu0 %v291
    %437 = vmatprep.subr.bf16.mxu0 0
    %438 = vmatpush1.bf16.msra.mxu0 %v292
    %439 = vmatprep.subr.bf16.mxu0 0
    %440 = vmatpush1.bf16.msra.mxu0 %v293
    %441 = vmatprep.subr.bf16.mxu0 0
    %442 = vmatpush1.bf16.msra.mxu0 %v294
    %443 = vmatprep.subr.bf16.mxu0 0
    %444 = vmatpush1.bf16.msra.mxu0 %v295
    %445 = vmatprep.subr.bf16.mxu0 0
    %446 = vmatpush1.bf16.msra.mxu0 %v296
    %447 = vmatprep.subr.bf16.mxu0 0
    %448 = vmatpush1.bf16.msra.mxu0 %v297
    %449 = vmatprep.subr.bf16.mxu0 0
    %450 = vmatpush1.bf16.msra.mxu0 %v298
    %451 = vmatprep.subr.bf16.mxu0 0
    %452 = vmatpush1.bf16.msra.mxu0 %v299
    %453 = vmatprep.subr.bf16.mxu0 0
    %454 = vmatpush1.bf16.msra.mxu0 %v300
    %455 = vmatprep.subr.bf16.mxu0 0
    %456 = vmatpush1.bf16.msra.mxu0 %v301
    %457 = vmatprep.subr.bf16.mxu0 0
    %458 = vmatpush1.bf16.msra.mxu0 %v302
    %459 = vmatprep.subr.bf16.mxu0 0
    %460 = vmatpush1.bf16.msra.mxu0 %v303
    %461 = vmatprep.subr.bf16.mxu0 0
    %462 = vmatpush1.bf16.msra.mxu0 %v304
    %463 = vmatprep.subr.bf16.mxu0 0
    %464 = vmatpush1.bf16.msra.mxu0 %v305
    %465 = vmatprep.subr.bf16.mxu0 0
    %466 = vmatpush1.bf16.msra.mxu0 %v306
    %467 = vmatprep.mubr.bf16.mxu0 %v48
    %468 = vmatmul.mubr.bf16.gmra.mrb[0].mxu0 %v47
    %v469 = vpop.f32.mrb[0].mxu0
    %v470 = vadd.f32 %v430, %v469
    %v471 = vpop.f32.mrb[0].mxu0
    %v472 = vpop.f32.mrb[0].mxu0
    %v473 = vpop.f32.mrb[0].mxu0
    %474 = vdwg.mxu0
    %475 = vmatprep.subr.bf16.mxu0 0
    %476 = vmatpush1.bf16.msra.mxu0 %v307
    %477 = vmatprep.subr.bf16.mxu0 0
    %478 = vmatpush1.bf16.msra.mxu0 %v308
    %479 = vmatprep.subr.bf16.mxu0 0
    %480 = vmatpush1.bf16.msra.mxu0 %v309
    %481 = vmatprep.subr.bf16.mxu0 0
    %482 = vmatpush1.bf16.msra.mxu0 %v310
    %483 = vmatprep.subr.bf16.mxu0 0
    %484 = vmatpush1.bf16.msra.mxu0 %v311
    %485 = vmatprep.subr.bf16.mxu0 0
    %486 = vmatpush1.bf16.msra.mxu0 %v312
    %487 = vmatprep.subr.bf16.mxu0 0
    %488 = vmatpush1.bf16.msra.mxu0 %v313
    %489 = vmatprep.subr.bf16.mxu0 0
    %490 = vmatpush1.bf16.msra.mxu0 %v314
    %491 = vmatprep.subr.bf16.mxu0 0
    %492 = vmatpush1.bf16.msra.mxu0 %v315
    %493 = vmatprep.subr.bf16.mxu0 0
    %494 = vmatpush1.bf16.msra.mxu0 %v316
    %495 = vmatprep.subr.bf16.mxu0 0
    %496 = vmatpush1.bf16.msra.mxu0 %v317
    %497 = vmatprep.subr.bf16.mxu0 0
    %498 = vmatpush1.bf16.msra.mxu0 %v318
    %499 = vmatprep.subr.bf16.mxu0 0
    %500 = vmatpush1.bf16.msra.mxu0 %v319
    %501 = vmatprep.subr.bf16.mxu0 0
    %502 = vmatpush1.bf16.msra.mxu0 %v320
    %503 = vmatprep.subr.bf16.mxu0 0
    %504 = vmatpush1.bf16.msra.mxu0 %v321
    %505 = vmatprep.subr.bf16.mxu0 0
    %506 = vmatpush1.bf16.msra.mxu0 %v322
    %507 = vmatprep.mubr.bf16.mxu0 %v50
    %508 = vmatmul.mubr.bf16.gmra.mrb[0].mxu0 %v49
    %v509 = vpop.f32.mrb[0].mxu0
    %v510 = vadd.f32 %v470, %v509
    %v511 = vpop.f32.mrb[0].mxu0
    %v512 = vpop.f32.mrb[0].mxu0
    %v513 = vpop.f32.mrb[0].mxu0
    %514 = vdwg.mxu0
    %515 = vmatprep.subr.bf16.mxu0 0
    %516 = vmatpush1.bf16.msra.mxu0 %v291
    %517 = vmatprep.subr.bf16.mxu0 0
    %518 = vmatpush1.bf16.msra.mxu0 %v292
    %519 = vmatprep.subr.bf16.mxu0 0
    %520 = vmatpush1.bf16.msra.mxu0 %v293
    %521 = vmatprep.subr.bf16.mxu0 0
    %522 = vmatpush1.bf16.msra.mxu0 %v294
    %523 = vmatprep.subr.bf16.mxu0 0
    %524 = vmatpush1.bf16.msra.mxu0 %v295
    %525 = vmatprep.subr.bf16.mxu0 0
    %526 = vmatpush1.bf16.msra.mxu0 %v296
    %527 = vmatprep.subr.bf16.mxu0 0
    %528 = vmatpush1.bf16.msra.mxu0 %v297
    %529 = vmatprep.subr.bf16.mxu0 0
    %530 = vmatpush1.bf16.msra.mxu0 %v298
    %531 = vmatprep.subr.bf16.mxu0 0
    %532 = vmatpush1.bf16.msra.mxu0 %v299
    %533 = vmatprep.subr.bf16.mxu0 0
    %534 = vmatpush1.bf16.msra.mxu0 %v300
    %535 = vmatprep.subr.bf16.mxu0 0
    %536 = vmatpush1.bf16.msra.mxu0 %v301
    %537 = vmatprep.subr.bf16.mxu0 0
    %538 = vmatpush1.bf16.msra.mxu0 %v302
    %539 = vmatprep.subr.bf16.mxu0 0
    %540 = vmatpush1.bf16.msra.mxu0 %v303
    %541 = vmatprep.subr.bf16.mxu0 0
    %542 = vmatpush1.bf16.msra.mxu0 %v304
    %543 = vmatprep.subr.bf16.mxu0 0
    %544 = vmatpush1.bf16.msra.mxu0 %v305
    %545 = vmatprep.subr.bf16.mxu0 0
    %546 = vmatpush1.bf16.msra.mxu0 %v306
    %547 = vmatprep.mubr.bf16.mxu0 %v96
    %548 = vmatmul.mubr.bf16.gmra.mrb[0].mxu0 %v95
    %v549 = vpop.f32.mrb[0].mxu0
    %v550 = vadd.f32 0.0, %v549
    %v551 = vpop.f32.mrb[0].mxu0
    %v552 = vpop.f32.mrb[0].mxu0
    %v553 = vpop.f32.mrb[0].mxu0
    %554 = vdwg.mxu0
    %555 = vmatprep.subr.bf16.mxu0 0
    %556 = vmatpush1.bf16.msra.mxu0 %v307
    %557 = vmatprep.subr.bf16.mxu0 0
    %558 = vmatpush1.bf16.msra.mxu0 %v308
    %559 = vmatprep.subr.bf16.mxu0 0
    %560 = vmatpush1.bf16.msra.mxu0 %v309
    %561 = vmatprep.subr.bf16.mxu0 0
    %562 = vmatpush1.bf16.msra.mxu0 %v310
    %563 = vmatprep.subr.bf16.mxu0 0
    %564 = vmatpush1.bf16.msra.mxu0 %v311
    %565 = vmatprep.subr.bf16.mxu0 0
    %566 = vmatpush1.bf16.msra.mxu0 %v312
    %567 = vmatprep.subr.bf16.mxu0 0
    %568 = vmatpush1.bf16.msra.mxu0 %v313
    %569 = vmatprep.subr.bf16.mxu0 0
    %570 = vmatpush1.bf16.msra.mxu0 %v314
    %571 = vmatprep.subr.bf16.mxu0 0
    %572 = vmatpush1.bf16.msra.mxu0 %v315
    %573 = vmatprep.subr.bf16.mxu0 0
    %574 = vmatpush1.bf16.msra.mxu0 %v316
    %575 = vmatprep.subr.bf16.mxu0 0
    %576 = vmatpush1.bf16.msra.mxu0 %v317
    %577 = vmatprep.subr.bf16.mxu0 0
    %578 = vmatpush1.bf16.msra.mxu0 %v318
    %579 = vmatprep.subr.bf16.mxu0 0
    %580 = vmatpush1.bf16.msra.mxu0 %v319
    %581 = vmatprep.subr.bf16.mxu0 0
    %582 = vmatpush1.bf16.msra.mxu0 %v320
    %583 = vmatprep.subr.bf16.mxu0 0
    %584 = vmatpush1.bf16.msra.mxu0 %v321
    %585 = vmatprep.subr.bf16.mxu0 0
    %586 = vmatpush1.bf16.msra.mxu0 %v322
    %587 = vmatprep.mubr.bf16.mxu0 %v98
    %588 = vmatmul.mubr.bf16.gmra.mrb[0].mxu0 %v97
    %v589 = vpop.f32.mrb[0].mxu0
    %v590 = vadd.f32 %v550, %v589
    %v591 = vpop.f32.mrb[0].mxu0
    %v592 = vpop.f32.mrb[0].mxu0
    %v593 = vpop.f32.mrb[0].mxu0
    %594 = vdwg.mxu0
    %v595 = vadd.f32 %v510, %v590
    %v596 = vmul.f32 %v595, 0.25
    %597 = vst [vmem:[#allocation7] sm:$0xf] %v596
    // Predicated region
    $region18: #{tpu_custom_call.1} parent=1 // pred_check
      _
    $region19: #{tpu_custom_call.1} parent=1 // pred_check_branch
      %599 = sbr.rel (0) target = $region21
    $region20: #{tpu_custom_call.1} parent=1 // pred_region
      %s601 = ssub.s32 64, 64
      %602 = vsyncadd [#allocation4], %s601
      %s604 = sshll.u32 [#allocation7], 4
      %s605 = int_to_ptr.vmem [resolvable:$true] %s604
      %607 = dma.vmem_to_hbm [thread:$0]  %s605, 64, %s2, [#allocation4]
    $region21: #{tpu_custom_call.1} parent=1 // pred_fallthru
      _
    // Predicated region
    $region22: #{tpu_custom_call.1} parent=1 // pred_check
      _
    $region23: #{tpu_custom_call.1} parent=1 // pred_check_branch
      %609 = sbr.rel (0) target = $region25
    $region24: #{tpu_custom_call.1} parent=1 // pred_region
      %610 = dma.done [#allocation4], 64
    $region25: #{tpu_custom_call.1} parent=1 // pred_fallthru
      _
    %611 = vsyncpa [#allocation3], 1
    %612 = vsyncpa [#allocation6], 1
    %613 = vsyncpa [#allocation4], 1

</llo_original>
